<compile_context>
chip_gen: v7x
topology: tpu7x:2x2x1
jax: 0.10.0
libtpu: 0.0.40
codegen_flags: <defaults>
</compile_context>

<pallas_src>
import jax
import jax.numpy as jnp
from jax.experimental import pallas as pl
from jax.experimental.pallas import tpu as pltpu


def _swish_kernel(x_ref, o_ref):
    x = x_ref[...]
    # sigmoid computed in f32 for stability; cast back to output dtype.
    xf = x.astype(jnp.float32)
    sig = 1.0 / (1.0 + jnp.exp(-xf))
    o_ref[...] = (xf * sig).astype(o_ref.dtype)


_LANE_CANDIDATES = (2048, 1024, 512, 256, 128)
_TARGET_BLOCK_BYTES = 2 * 1024 * 1024  # ~2 MiB per block


def _pick_2d_layout(shape):
    """Choose a lane-dense (rows, cols) slab for the flattened tensor."""
    n = 1
    for d in shape:
        n *= d
    # Prefer a wide, 128-multiple lane axis when the total size allows it.
    for c in _LANE_CANDIDATES:
        if n % c == 0:
            return n // c, c
    # Fallback: keep the original trailing dim as the lane axis. A full-width
    # column block is always legal even if it is not a multiple of 128.
    c = shape[-1] if len(shape) >= 1 else 1
    return n // c, c


def swish(x: jax.Array) -> jax.Array:
    """Elementwise Swish: x * sigmoid(x). Matches torch `x * nn.Sigmoid()(x)`."""
    orig_shape = x.shape
    orig_dtype = x.dtype
    if x.size == 0:
        return x

    rows, cols = _pick_2d_layout(orig_shape if x.ndim > 0 else (1,))
    x2 = x.reshape(rows, cols)
    itemsize = jnp.dtype(orig_dtype).itemsize

    # Column tile: full width when modest; otherwise a wide 128-multiple slice.
    if cols <= 2048 or cols % 128 != 0:
        tc = cols
    else:
        tc = 2048

    # Row tile: aim for ~2 MiB blocks (4x block bytes live with double-buffered
    # in + out still fits v5e's 16 MiB scoped VMEM default). Multiple of 8, or
    # the full row extent when that is small.
    if rows <= 8:
        tr = rows  # full-dim block is always legal
    else:
        max_rows_for_budget = max(8, _TARGET_BLOCK_BYTES // max(1, tc * itemsize))
        tr = min(rows, max_rows_for_budget)
        tr = max(8, (tr // 8) * 8)

    grid = (pl.cdiv(rows, tr), pl.cdiv(cols, tc))

    out = pl.pallas_call(
        _swish_kernel,
        out_shape=jax.ShapeDtypeStruct((rows, cols), orig_dtype),
        grid_spec=pltpu.PrefetchScalarGridSpec(
            num_scalar_prefetch=0,
            grid=grid,
            in_specs=[pl.BlockSpec((tr, tc), lambda i, j: (i, j))],
            out_specs=pl.BlockSpec((tr, tc), lambda i, j: (i, j)),
        ),
        compiler_params=pltpu.CompilerParams(
            dimension_semantics=("parallel", "parallel"),
        ),
    )(x2)

    return out.reshape(orig_shape)


if __name__ == "__main__":
    key = jax.random.PRNGKey(0)

    # Conv1d-style input: [batch=2, channels=4, length=16] (total divisible by
    # 128 -> lane-dense path).
    x = jax.random.normal(key, (2, 4, 16), dtype=jnp.float32)
    y = swish(x)
    jax.block_until_ready(y)
    y_ref = x * jax.nn.sigmoid(x)
    assert y.shape == x.shape and y.dtype == x.dtype
    assert jnp.allclose(y, y_ref, atol=1e-6, rtol=1e-6)

    # Odd-sized input to exercise the fallback (non-128-divisible total).
    x2 = jax.random.normal(jax.random.PRNGKey(1), (2, 3, 5), dtype=jnp.float32)
    y2 = swish(x2)
    jax.block_until_ready(y2)
    y2_ref = x2 * jax.nn.sigmoid(x2)
    assert y2.shape == x2.shape and y2.dtype == x2.dtype
    assert jnp.allclose(y2, y2_ref, atol=1e-6, rtol=1e-6)

    print("KERNEL_OK")
</pallas_src>

<mosaic_0001>
module attributes {stable_mosaic.version = 11 : i64} {
  func.func @_swish_kernel(%arg0: i32, %arg1: i32, %arg2: memref<1x128xf32, #tpu.memory_space<vmem>>, %arg3: memref<1x128xf32, #tpu.memory_space<vmem>>) attributes {dimension_semantics = [#tpu.dimension_semantics<parallel>, #tpu.dimension_semantics<parallel>], iteration_bounds = array<i64: 1, 1>, scalar_prefetch = 0 : i64, scratch_operands = 0 : i64, tpu.core_type = #tpu.core_type<tc>, window_params = [{transform_indices = @transform_0, window_bounds = array<i64: 1, 128>}, {transform_indices = @transform_1, window_bounds = array<i64: 1, 128>}]} {
    %c0 = arith.constant 0 : index
    %c0_0 = arith.constant 0 : index
    %0 = vector.load %arg2[%c0, %c0_0] : memref<1x128xf32, #tpu.memory_space<vmem>>, vector<1x128xf32>
    %cst = arith.constant 0.000000e+00 : f32
    %1 = vector.broadcast %cst : f32 to vector<1x128xf32>
    %2 = arith.subf %1, %0 : vector<1x128xf32>
    %3 = math.exp %2 : vector<1x128xf32>
    %cst_1 = arith.constant 1.000000e+00 : f32
    %4 = vector.broadcast %cst_1 : f32 to vector<1x128xf32>
    %5 = arith.addf %4, %3 : vector<1x128xf32>
    %cst_2 = arith.constant 1.000000e+00 : f32
    %6 = vector.broadcast %cst_2 : f32 to vector<1x128xf32>
    %7 = arith.divf %6, %5 : vector<1x128xf32>
    %8 = arith.mulf %0, %7 : vector<1x128xf32>
    %c0_3 = arith.constant 0 : index
    %c0_4 = arith.constant 0 : index
    %9 = vector.load %arg3[%c0_3, %c0_4] : memref<1x128xf32, #tpu.memory_space<vmem>>, vector<1x128xf32>
    tpu.vector_store %arg3[%c0_3, %c0_4], %8 {strides = array<i32>} : memref<1x128xf32, #tpu.memory_space<vmem>>, vector<1x128xf32>,
    return
  }
  func.func @transform_0(%arg0: i32, %arg1: i32) -> (i32, i32) {
    %c0_i32 = arith.constant 0 : i32
    return %arg0, %arg1 : i32, i32
  }
  func.func @transform_1(%arg0: i32, %arg1: i32) -> (i32, i32) {
    %c0_i32 = arith.constant 0 : i32
    return %arg0, %arg1 : i32, i32
  }
}

</mosaic_0001>

<llo_original>
// kernel: tpu_custom_call.1
$region0: #{tpu_custom_call.1}
  #allocation0 [shape = 'u32[]', space=smem, size = 0x4, offset = 0x4, fixed_abs, tag = 'smem constant byte address 0x4 - core index']
  #allocation1 [shape = 'u32[144,128]{1,0:T(1,128)}', space=vmem, size = 0x12000, scoped, tag = 'internal scratch']
  %s0 = inlined_call_operand.hbm [shape: f32[1,128], index: 0, kind: input, shape index: {}]
  %s1 = inlined_call_operand.hbm [shape: f32[1,128], index: 1, kind: output, shape index: {}]
  %s2 = sld [smem:[#allocation0]]
  $region18: #{tpu_custom_call.1} parent=0
    _
  %s4 = ssub.s32 1, %s2
  %s5 = scalar_select 0, %s4, %s2
  $region1: #{tpu_custom_call.1} parent=0
    #allocation2 [shape = 'u8[512]{0}', space=vmem, size = 0x400, scoped, tag = 'input window, operand 0, single buffered']
    #allocation3 [shape = 's32[1]{0}', space=sflag, size = 0x4, scoped, tag = 'scoped memory for tpu_custom_call.1']
    #allocation4 [shape = 's32[1]{0}', space=sflag, size = 0x4, scoped, tag = 'scoped memory for tpu_custom_call.1']
    #allocation5 [shape = 'u8[512]{0}', space=vmem, size = 0x400, scoped, tag = 'output window, operand 0, single buffered']
    %6 = vsyncpa [#allocation3], 0
    %7 = vsyncpa [#allocation4], 0
    // Predicated region
    $region2: #{tpu_custom_call.1} parent=1 // pred_check
      _
    $region3: #{tpu_custom_call.1} parent=1 // pred_check_branch
      %9 = sbr.rel (0) target = $region5
    $region4: #{tpu_custom_call.1} parent=1 // pred_region
      %s11 = ssub.s32 16, 16
      %12 = vsyncadd [#allocation3], %s11
      %s14 = sshll.u32 [#allocation2], 4
      %s15 = int_to_ptr.vmem [resolvable:$true] %s14
      %17 = dma.hbm_to_vmem [thread:$0]  %s0, 16, %s15, [#allocation3]
    $region5: #{tpu_custom_call.1} parent=1 // pred_fallthru
      _
    // Predicated region
    $region6: #{tpu_custom_call.1} parent=1 // pred_check
      _
    $region7: #{tpu_custom_call.1} parent=1 // pred_check_branch
      %19 = sbr.rel (0) target = $region9
    $region8: #{tpu_custom_call.1} parent=1 // pred_region
      %20 = dma.done [#allocation3], 16
    $region9: #{tpu_custom_call.1} parent=1 // pred_fallthru
      _
    %v21 = vld [vmem:[#allocation2] sm:$0x1]
    %v22 = vsub.f32 0.0, %v21
    %v23 = vmul.f32 %v22, 1.442695
    %v24 = vpow.pop %v23
    %v25 = vadd.f32 %v24, 1.0
    %v26 = vrcp.pop %v25
    %v27 = vmul.f32 1.0, %v26
    %v28 = vmul.f32 %v21, %v27
    %29 = vst [vmem:[#allocation5] sm:$0x1] %v28
    // Predicated region
    $region10: #{tpu_custom_call.1} parent=1 // pred_check
      _
    $region11: #{tpu_custom_call.1} parent=1 // pred_check_branch
      %31 = sbr.rel (0) target = $region13
    $region12: #{tpu_custom_call.1} parent=1 // pred_region
      %s33 = ssub.s32 16, 16
      %34 = vsyncadd [#allocation4], %s33
      %s36 = sshll.u32 [#allocation5], 4
      %s37 = int_to_ptr.vmem [resolvable:$true] %s36
      %39 = dma.vmem_to_hbm [thread:$0]  %s37, 16, %s1, [#allocation4]
    $region13: #{tpu_custom_call.1} parent=1 // pred_fallthru
      _
    // Predicated region
    $region14: #{tpu_custom_call.1} parent=1 // pred_check
      _
    $region15: #{tpu_custom_call.1} parent=1 // pred_check_branch
      %41 = sbr.rel (0) target = $region17
    $region16: #{tpu_custom_call.1} parent=1 // pred_region
      %42 = dma.done [#allocation4], 16
    $region17: #{tpu_custom_call.1} parent=1 // pred_fallthru
      _
    %43 = vsyncpa [#allocation3], 1
    %44 = vsyncpa [#allocation4], 1

</llo_original>
